<compile_context>
chip_gen: v7x
topology: tpu7x:2x2x1
jax: 0.10.0
libtpu: 0.0.40
codegen_flags: <defaults>
</compile_context>

<pallas_src>
import jax
import jax.numpy as jnp
from jax.experimental import pallas as pl
from jax.experimental.pallas import tpu as pltpu

_LANES = 128
_SUBLANES = 8


def _round_up(x, m):
    return -(-x // m) * m


def _mae_partial_kernel(f_ref, t_ref, w_ref, o_ref):
    # Hot path: pure VPU elementwise work, reduced only down to one
    # vreg-shaped (8, 128) partial per tile.  The expensive cross-lane /
    # cross-sublane reduction is deferred to a one-time epilogue in the
    # wrapper, outside the bandwidth-bound loop.
    x = jnp.abs(f_ref[...] - t_ref[...]) * w_ref[...]        # (tile_rows, 128)
    tile_rows = x.shape[0]
    o_ref[...] = jnp.sum(
        x.reshape(tile_rows // _SUBLANES, _SUBLANES, _LANES), axis=0
    )


def mae_loss(forecast, target, weights, *, tile_rows=4096):
    """Weighted MAE: mean(|forecast - target| * weights) over all elements."""
    assert forecast.shape == target.shape == weights.shape
    n = forecast.size

    # Flatten to 1-D, then view as a lane-dense (rows, 128) slab.
    f = forecast.reshape(-1).astype(jnp.float32)
    t = target.reshape(-1).astype(jnp.float32)
    w = weights.reshape(-1).astype(jnp.float32)

    rows = -(-n // _LANES)                       # cdiv(n, 128)
    rows_r8 = _round_up(rows, _SUBLANES)

    # Clamp the tile so small problems become a single grid step, and pick a
    # tile that evenly divides the (lightly) padded row count so padding waste
    # is at most ~8 rows per tile.
    tile_rows = max(_SUBLANES, min(tile_rows, rows_r8))
    num_tiles = -(-rows_r8 // tile_rows)
    tile_rows = _round_up(-(-rows_r8 // num_tiles), _SUBLANES)
    padded_rows = num_tiles * tile_rows
    padded_n = padded_rows * _LANES

    if padded_n != n:
        pad = (0, padded_n - n)
        # Zero padding is exact: |0 - 0| * 0 contributes nothing to the sum.
        f = jnp.pad(f, pad)
        t = jnp.pad(t, pad)
        w = jnp.pad(w, pad)

    f2 = f.reshape(padded_rows, _LANES)
    t2 = t.reshape(padded_rows, _LANES)
    w2 = w.reshape(padded_rows, _LANES)

    in_spec = pl.BlockSpec((tile_rows, _LANES), lambda i: (i, 0))

    partials = pl.pallas_call(
        _mae_partial_kernel,
        out_shape=jax.ShapeDtypeStruct(
            (num_tiles * _SUBLANES, _LANES), jnp.float32
        ),
        grid_spec=pltpu.PrefetchScalarGridSpec(
            num_scalar_prefetch=0,
            grid=(num_tiles,),
            in_specs=[in_spec, in_spec, in_spec],
            out_specs=pl.BlockSpec((_SUBLANES, _LANES), lambda i: (i, 0)),
        ),
        compiler_params=pltpu.CompilerParams(
            # Each tile writes its own partial -> fully parallel grid axis.
            dimension_semantics=("parallel",),
            # 3 inputs x 2 pipeline buffers x 2 MiB blocks ~= 12 MiB; raise the
            # scoped limit so v5e's 16 MiB default has headroom while staying
            # well under v7x's 64 MiB physical VMEM.
            vmem_limit_bytes=32 * 1024 * 1024,
        ),
    )(f2, t2, w2)

    # One-time tiny epilogue reduction + mean (true element count, not padded).
    return jnp.sum(partials) / jnp.float32(n)


if __name__ == "__main__":
    key = jax.random.PRNGKey(0)
    kf, kt, kw = jax.random.split(key, 3)

    B, T = 16, 128  # batch, time
    forecast = jax.random.normal(kf, (B, T), dtype=jnp.float32)
    target = jax.random.normal(kt, (B, T), dtype=jnp.float32)
    weights = jax.random.uniform(kw, (B, T), dtype=jnp.float32)

    loss = mae_loss(forecast, target, weights)
    loss = jax.block_until_ready(loss)

    # Pure-JAX reference check.
    ref = jnp.mean(jnp.abs(forecast - target) * weights)
    assert jnp.allclose(loss, ref, rtol=1e-6, atol=1e-6), (loss, ref)

    print("KERNEL_OK")
</pallas_src>

<mosaic_0001>
module attributes {stable_mosaic.version = 11 : i64} {
  func.func @_mae_partial_kernel(%arg0: i32, %arg1: memref<16x128xf32, #tpu.memory_space<vmem>>, %arg2: memref<16x128xf32, #tpu.memory_space<vmem>>, %arg3: memref<16x128xf32, #tpu.memory_space<vmem>>, %arg4: memref<8x128xf32, #tpu.memory_space<vmem>>) attributes {dimension_semantics = [#tpu.dimension_semantics<parallel>], iteration_bounds = array<i64: 1>, scalar_prefetch = 0 : i64, scratch_operands = 0 : i64, tpu.core_type = #tpu.core_type<tc>, window_params = [{transform_indices = @transform_0, window_bounds = array<i64: 16, 128>}, {transform_indices = @transform_1, window_bounds = array<i64: 16, 128>}, {transform_indices = @transform_2, window_bounds = array<i64: 16, 128>}, {transform_indices = @transform_3, window_bounds = array<i64: 8, 128>}]} {
    %c0 = arith.constant 0 : index
    %c0_0 = arith.constant 0 : index
    %0 = vector.load %arg1[%c0, %c0_0] : memref<16x128xf32, #tpu.memory_space<vmem>>, vector<16x128xf32>
    %c0_1 = arith.constant 0 : index
    %c0_2 = arith.constant 0 : index
    %1 = vector.load %arg2[%c0_1, %c0_2] : memref<16x128xf32, #tpu.memory_space<vmem>>, vector<16x128xf32>
    %2 = arith.subf %0, %1 : vector<16x128xf32>
    %3 = math.absf %2 : vector<16x128xf32>
    %c0_3 = arith.constant 0 : index
    %c0_4 = arith.constant 0 : index
    %4 = vector.load %arg3[%c0_3, %c0_4] : memref<16x128xf32, #tpu.memory_space<vmem>>, vector<16x128xf32>
    %5 = arith.mulf %3, %4 : vector<16x128xf32>
    %6 = vector.shape_cast %5 : vector<16x128xf32> to vector<2x8x128xf32>
    %cst = arith.constant dense<0.000000e+00> : vector<8x128xf32>
    %7 = vector.multi_reduction <add>, %6, %cst [0] : vector<2x8x128xf32> to vector<8x128xf32>
    %c0_5 = arith.constant 0 : index
    %c0_6 = arith.constant 0 : index
    %8 = vector.load %arg4[%c0_5, %c0_6] : memref<8x128xf32, #tpu.memory_space<vmem>>, vector<8x128xf32>
    tpu.vector_store %arg4[%c0_5, %c0_6], %7 {strides = array<i32>} : memref<8x128xf32, #tpu.memory_space<vmem>>, vector<8x128xf32>,
    return
  }
  func.func @transform_0(%arg0: i32) -> (i32, i32) {
    %c0_i32 = arith.constant 0 : i32
    %c0_i32_0 = arith.constant 0 : i32
    return %arg0, %c0_i32 : i32, i32
  }
  func.func @transform_1(%arg0: i32) -> (i32, i32) {
    %c0_i32 = arith.constant 0 : i32
    %c0_i32_0 = arith.constant 0 : i32
    return %arg0, %c0_i32 : i32, i32
  }
  func.func @transform_2(%arg0: i32) -> (i32, i32) {
    %c0_i32 = arith.constant 0 : i32
    %c0_i32_0 = arith.constant 0 : i32
    return %arg0, %c0_i32 : i32, i32
  }
  func.func @transform_3(%arg0: i32) -> (i32, i32) {
    %c0_i32 = arith.constant 0 : i32
    %c0_i32_0 = arith.constant 0 : i32
    return %arg0, %c0_i32 : i32, i32
  }
}

</mosaic_0001>

<llo_original>
// kernel: tpu_custom_call.1
$region0: #{tpu_custom_call.1}
  #allocation0 [shape = 'u32[]', space=smem, size = 0x4, offset = 0x4, fixed_abs, tag = 'smem constant byte address 0x4 - core index']
  #allocation1 [shape = 'u32[144,128]{1,0:T(1,128)}', space=vmem, size = 0x12000, scoped, tag = 'internal scratch']
  %s0 = inlined_call_operand.hbm [shape: f32[16,128], index: 0, kind: input, shape index: {}]
  %s1 = inlined_call_operand.hbm [shape: f32[16,128], index: 1, kind: input, shape index: {}]
  %s2 = inlined_call_operand.hbm [shape: f32[16,128], index: 2, kind: input, shape index: {}]
  %s3 = inlined_call_operand.hbm [shape: f32[8,128], index: 3, kind: output, shape index: {}]
  %s4 = sld [smem:[#allocation0]]
  $region34: #{tpu_custom_call.1} parent=0
    _
  %s6 = ssub.s32 1, %s4
  %s7 = scalar_select 0, %s6, %s4
  $region1: #{tpu_custom_call.1} parent=0
    #allocation2 [shape = 'u8[8192]{0}', space=vmem, size = 0x2000, scoped, tag = 'input window, operand 0, single buffered']
    #allocation3 [shape = 's32[1]{0}', space=sflag, size = 0x4, scoped, tag = 'scoped memory for tpu_custom_call.1']
    #allocation4 [shape = 's32[1]{0}', space=sflag, size = 0x4, scoped, tag = 'scoped memory for tpu_custom_call.1']
    #allocation5 [shape = 'u8[8192]{0}', space=vmem, size = 0x2000, scoped, tag = 'input window, operand 1, single buffered']
    #allocation6 [shape = 's32[1]{0}', space=sflag, size = 0x4, scoped, tag = 'scoped memory for tpu_custom_call.1']
    #allocation7 [shape = 'u8[8192]{0}', space=vmem, size = 0x2000, scoped, tag = 'input window, operand 2, single buffered']
    #allocation8 [shape = 'u8[4096]{0}', space=vmem, size = 0x1000, scoped, tag = 'output window, operand 0, single buffered']
    %8 = vsyncpa [#allocation3], 0
    %9 = vsyncpa [#allocation6], 0
    %10 = vsyncpa [#allocation4], 0
    // Predicated region
    $region2: #{tpu_custom_call.1} parent=1 // pred_check
      _
    $region3: #{tpu_custom_call.1} parent=1 // pred_check_branch
      %12 = sbr.rel (0) target = $region5
    $region4: #{tpu_custom_call.1} parent=1 // pred_region
      %s14 = ssub.s32 256, 256
      %15 = vsyncadd [#allocation3], %s14
      %s16 = sshll.u32 [#allocation2], 4
      %s17 = int_to_ptr.vmem [resolvable:$true] %s16
      %22 = dma.hbm_to_vmem [thread:$0]  %s0, 256, %s17, [#allocation3], 128, 128, 8
    $region5: #{tpu_custom_call.1} parent=1 // pred_fallthru
      _
    // Predicated region
    $region6: #{tpu_custom_call.1} parent=1 // pred_check
      _
    $region7: #{tpu_custom_call.1} parent=1 // pred_check_branch
      %24 = sbr.rel (0) target = $region9
    $region8: #{tpu_custom_call.1} parent=1 // pred_region
      %s26 = ssub.s32 256, 256
      %27 = vsyncadd [#allocation6], %s26
      %s28 = sshll.u32 [#allocation5], 4
      %s29 = int_to_ptr.vmem [resolvable:$true] %s28
      %34 = dma.hbm_to_vmem [thread:$0]  %s1, 256, %s29, [#allocation6], 128, 128, 8
    $region9: #{tpu_custom_call.1} parent=1 // pred_fallthru
      _
    // Predicated region
    $region10: #{tpu_custom_call.1} parent=1 // pred_check
      _
    $region11: #{tpu_custom_call.1} parent=1 // pred_check_branch
      %36 = sbr.rel (0) target = $region13
    $region12: #{tpu_custom_call.1} parent=1 // pred_region
      %s38 = ssub.s32 256, 256
      %39 = vsyncadd [#allocation6], %s38
      %s40 = sshll.u32 [#allocation7], 4
      %s41 = int_to_ptr.vmem [resolvable:$true] %s40
      %46 = dma.hbm_to_vmem [thread:$0]  %s2, 256, %s41, [#allocation6], 128, 128, 8
    $region13: #{tpu_custom_call.1} parent=1 // pred_fallthru
      _
    // Predicated region
    $region14: #{tpu_custom_call.1} parent=1 // pred_check
      _
    $region15: #{tpu_custom_call.1} parent=1 // pred_check_branch
      %48 = sbr.rel (0) target = $region17
    $region16: #{tpu_custom_call.1} parent=1 // pred_region
      %49 = dma.done [#allocation3], 256
    $region17: #{tpu_custom_call.1} parent=1 // pred_fallthru
      _
    // Predicated region
    $region18: #{tpu_custom_call.1} parent=1 // pred_check
      _
    $region19: #{tpu_custom_call.1} parent=1 // pred_check_branch
      %51 = sbr.rel (0) target = $region21
    $region20: #{tpu_custom_call.1} parent=1 // pred_region
      %52 = dma.done [#allocation6], 256
    $region21: #{tpu_custom_call.1} parent=1 // pred_fallthru
      _
    // Predicated region
    $region22: #{tpu_custom_call.1} parent=1 // pred_check
      _
    $region23: #{tpu_custom_call.1} parent=1 // pred_check_branch
      %54 = sbr.rel (0) target = $region25
    $region24: #{tpu_custom_call.1} parent=1 // pred_region
      %55 = dma.done [#allocation6], 256
    $region25: #{tpu_custom_call.1} parent=1 // pred_fallthru
      _
    %v56 = vld [vmem:[#allocation2] sm:$0xff]
    %v57 = vld [vmem:[#allocation2 + $0x8] sm:$0xff]
    %v58 = vld [vmem:[#allocation5] sm:$0xff]
    %v59 = vld [vmem:[#allocation5 + $0x8] sm:$0xff]
    %v60 = vsub.f32 %v56, %v58
    %v61 = vsub.f32 %v57, %v59
    %v62 = vand.u32 2147483647, %v60
    %v63 = vand.u32 2147483647, %v61
    %v64 = vld [vmem:[#allocation7] sm:$0xff]
    %v65 = vld [vmem:[#allocation7 + $0x8] sm:$0xff]
    %v66 = vmul.f32 %v62, %v64
    %v67 = vmul.f32 %v63, %v65
    %v68 = vadd.f32 %v66, %v67
    %69 = vst [vmem:[#allocation8] sm:$0xff] %v68
    // Predicated region
    $region26: #{tpu_custom_call.1} parent=1 // pred_check
      _
    $region27: #{tpu_custom_call.1} parent=1 // pred_check_branch
      %71 = sbr.rel (0) target = $region29
    $region28: #{tpu_custom_call.1} parent=1 // pred_region
      %s73 = ssub.s32 128, 128
      %74 = vsyncadd [#allocation4], %s73
      %s76 = sshll.u32 [#allocation8], 4
      %s77 = int_to_ptr.vmem [resolvable:$true] %s76
      %79 = dma.vmem_to_hbm [thread:$0]  %s77, 128, %s3, [#allocation4]
    $region29: #{tpu_custom_call.1} parent=1 // pred_fallthru
      _
    // Predicated region
    $region30: #{tpu_custom_call.1} parent=1 // pred_check
      _
    $region31: #{tpu_custom_call.1} parent=1 // pred_check_branch
      %81 = sbr.rel (0) target = $region33
    $region32: #{tpu_custom_call.1} parent=1 // pred_region
      %82 = dma.done [#allocation4], 128
    $region33: #{tpu_custom_call.1} parent=1 // pred_fallthru
      _
    %83 = vsyncpa [#allocation3], 1
    %84 = vsyncpa [#allocation6], 1
    %85 = vsyncpa [#allocation4], 1

</llo_original>
